<compile_context>
chip_gen: v7x
topology: tpu7x:2x2x1
jax: 0.10.0
libtpu: 0.0.40
codegen_flags: <defaults>
</compile_context>

<pallas_src>
import functools

import jax
import jax.numpy as jnp
from jax.experimental import pallas as pl
from jax.experimental.pallas import tpu as pltpu


def _round_up(n: int, m: int) -> int:
    return ((n + m - 1) // m) * m


def _round_down(n: int, m: int) -> int:
    return (n // m) * m


def _cdiv(a: int, b: int) -> int:
    return (a + b - 1) // b


def mlp_kernel(x_ref, w1_ref, b1_ref, w2_ref, b2_ref, o_ref):
    # x_ref:  (TB, D_in)      w1_ref: (D_in, H_p)    b1_ref: (1, H_p)   [f32]
    # w2_ref: (H_p, D_out_p)  b2_ref: (1, D_out_p)   o_ref:  (TB, D_out_p)
    h = jnp.dot(x_ref[...], w1_ref[...], preferred_element_type=jnp.float32)
    h = jnp.maximum(h + b1_ref[...], 0.0)                     # bias + ReLU in f32
    # Second GEMM in the weights' dtype (bf16 on the opt-in low-precision path,
    # f32 otherwise), always accumulating in f32.
    out = jnp.dot(h.astype(w2_ref.dtype), w2_ref[...],
                  preferred_element_type=jnp.float32) + b2_ref[...]
    o_ref[...] = out.astype(o_ref.dtype)


def _choose_batch_tile(B: int, batch_tile: int, sub: int) -> int:
    """Largest sublane-aligned tile <= batch_tile, with >= 2 grid steps when
    possible (so the 'parallel' batch axis shards across v7x's 2 TCs)."""
    if B <= sub:
        return B                              # single block == full dim (legal)
    tb = min(batch_tile, B)
    tb = max(sub, _round_down(tb, sub))
    if _cdiv(B, tb) < 2:                      # force 2 steps for megacore
        tb = max(sub, _round_up(_cdiv(B, 2), sub))
        if tb >= B:
            tb = B                            # cannot split at sublane granularity
    return tb


@functools.partial(jax.jit, static_argnames=("batch_tile",))
def net_forward(x, w1, b1, w2, b2, *, batch_tile=1024):
    """x: (B, C, H, W) or (B, D_in). Returns (B, num_classes) float32.

    Pass x in bf16 to opt into the reduced-precision (bf16 operands, f32
    accumulation) path; no wrapper-side copy/cast of x is ever made.
    """
    B = x.shape[0]
    x2d = x.reshape(B, -1)                    # nn.Flatten (row-major, as torch)
    d_in = x2d.shape[1]
    hidden = w1.shape[1]
    d_out = w2.shape[1]

    # Lane-aligned padded sizes for the tiny operands only (zero pad is exact).
    h_p = _round_up(hidden, 128)              # 3  -> 128
    d_out_p = _round_up(d_out, 128)           # 10 -> 128 (lane-dense output)

    in_dtype = x2d.dtype                      # caller-controlled; no x copy/cast
    sub = 16 if in_dtype == jnp.bfloat16 else 8
    tb = _choose_batch_tile(B, batch_tile, sub)
    grid = (_cdiv(B, tb),)

    # One-time, few-hundred-KiB weight/bias padding (negligible HBM traffic).
    w1_p = jnp.zeros((d_in, h_p), in_dtype).at[:, :hidden].set(w1.astype(in_dtype))
    b1_p = jnp.zeros((1, h_p), jnp.float32).at[0, :hidden].set(b1.astype(jnp.float32))
    w2_p = jnp.zeros((h_p, d_out_p), in_dtype).at[:hidden, :d_out].set(w2.astype(in_dtype))
    b2_p = jnp.zeros((1, d_out_p), jnp.float32).at[0, :d_out].set(b2.astype(jnp.float32))

    out_padded = pl.pallas_call(
        mlp_kernel,
        out_shape=jax.ShapeDtypeStruct((B, d_out_p), jnp.float32),
        grid_spec=pltpu.PrefetchScalarGridSpec(
            num_scalar_prefetch=0,
            grid=grid,
            in_specs=[
                # x marches along the batch axis; last block dim == full array
                # dim (784), so no feature padding / no HBM copy is needed.
                pl.BlockSpec((tb, d_in), lambda i: (i, 0)),
                # Weights / biases: constant block index -> resident in VMEM.
                pl.BlockSpec((d_in, h_p), lambda i: (0, 0)),
                pl.BlockSpec((1, h_p), lambda i: (0, 0)),
                pl.BlockSpec((h_p, d_out_p), lambda i: (0, 0)),
                pl.BlockSpec((1, d_out_p), lambda i: (0, 0)),
            ],
            out_specs=pl.BlockSpec((tb, d_out_p), lambda i: (i, 0)),
        ),
        compiler_params=pltpu.CompilerParams(
            # Independent batch tiles -> shard across both TCs on v7x.
            dimension_semantics=("parallel",),
            # TB=1024 f32 working set ~8 MiB: fits v5e's 16 MiB scoped-VMEM
            # default and v6e/v7x's 32 MiB.  Set vmem_limit_bytes only if
            # batch_tile is pushed to ~2048 on v5e.
        ),
    )(x2d, w1_p, b1_p, w2_p, b2_p)

    return out_padded[:, :d_out]


def init_params(key, input_size=784, hidden_size=3, num_classes=10):
    # Deterministic init mimicking torch.nn.Linear (uniform +/- 1/sqrt(fan_in)).
    k1, k2, k3, k4 = jax.random.split(key, 4)
    bound1 = 1.0 / (input_size ** 0.5)
    bound2 = 1.0 / (hidden_size ** 0.5)
    w1 = jax.random.uniform(k1, (input_size, hidden_size), jnp.float32, -bound1, bound1)
    b1 = jax.random.uniform(k2, (hidden_size,), jnp.float32, -bound1, bound1)
    w2 = jax.random.uniform(k3, (hidden_size, num_classes), jnp.float32, -bound2, bound2)
    b2 = jax.random.uniform(k4, (num_classes,), jnp.float32, -bound2, bound2)
    return w1, b1, w2, b2


if __name__ == "__main__":
    key = jax.random.PRNGKey(0)
    kx, kp, kb = jax.random.split(key, 3)

    input_size, hidden_size, num_classes = 784, 3, 10
    w1, b1, w2, b2 = init_params(kp, input_size, hidden_size, num_classes)

    # --- Small MNIST-like NCHW batch (single full-batch block path). ---
    x = jax.random.normal(kx, (2, 1, 28, 28), jnp.float32)
    ref = jnp.maximum(x.reshape(2, -1) @ w1 + b1, 0.0) @ w2 + b2
    out = jax.block_until_ready(net_forward(x, w1, b1, w2, b2))
    assert out.shape == (2, num_classes)
    assert jnp.allclose(out, ref, atol=1e-3, rtol=1e-3), "f32 path mismatch"

    # --- Larger batch: multi-step grid + batch edge-block handling. ---
    xb = jax.random.normal(kb, (100, input_size), jnp.float32)
    refb = jnp.maximum(xb @ w1 + b1, 0.0) @ w2 + b2
    outb = jax.block_until_ready(net_forward(xb, w1, b1, w2, b2))
    assert outb.shape == (100, num_classes)
    assert jnp.allclose(outb, refb, atol=1e-3, rtol=1e-3), "edge-block path mismatch"

    # --- Opt-in bf16 input path (caller supplies bf16 x; no wrapper copy). ---
    out_bf16 = jax.block_until_ready(net_forward(x.astype(jnp.bfloat16), w1, b1, w2, b2))
    assert out_bf16.shape == (2, num_classes)
    assert jnp.allclose(out_bf16, ref, atol=1e-1, rtol=1e-1), "bf16 path mismatch"

    print("KERNEL_OK")
</pallas_src>

<mosaic_0001>
module attributes {stable_mosaic.version = 11 : i64} {
  func.func @mlp_kernel(%arg0: i32, %arg1: memref<2x784xf32, #tpu.memory_space<vmem>>, %arg2: memref<784x128xf32, #tpu.memory_space<vmem>>, %arg3: memref<1x128xf32, #tpu.memory_space<vmem>>, %arg4: memref<128x128xf32, #tpu.memory_space<vmem>>, %arg5: memref<1x128xf32, #tpu.memory_space<vmem>>, %arg6: memref<2x128xf32, #tpu.memory_space<vmem>>) attributes {dimension_semantics = [#tpu.dimension_semantics<parallel>], iteration_bounds = array<i64: 1>, scalar_prefetch = 0 : i64, scratch_operands = 0 : i64, tpu.core_type = #tpu.core_type<tc>, window_params = [{transform_indices = @transform_0, window_bounds = array<i64: 2, 784>}, {pipeline_mode = #tpu.pipeline_mode<synchronous>, transform_indices = @transform_1, window_bounds = array<i64: 784, 128>}, {pipeline_mode = #tpu.pipeline_mode<synchronous>, transform_indices = @transform_2, window_bounds = array<i64: 1, 128>}, {pipeline_mode = #tpu.pipeline_mode<synchronous>, transform_indices = @transform_3, window_bounds = array<i64: 128, 128>}, {pipeline_mode = #tpu.pipeline_mode<synchronous>, transform_indices = @transform_4, window_bounds = array<i64: 1, 128>}, {transform_indices = @transform_5, window_bounds = array<i64: 2, 128>}]} {
    %c0 = arith.constant 0 : index
    %c0_0 = arith.constant 0 : index
    %0 = vector.load %arg1[%c0, %c0_0] : memref<2x784xf32, #tpu.memory_space<vmem>>, vector<2x784xf32>
    %c0_1 = arith.constant 0 : index
    %c0_2 = arith.constant 0 : index
    %1 = vector.load %arg2[%c0_1, %c0_2] : memref<784x128xf32, #tpu.memory_space<vmem>>, vector<784x128xf32>
    %cst = arith.constant dense<0.000000e+00> : vector<2x128xf32>
    %2 = tpu.matmul %0, %1, %cst {dimension_numbers = #tpu.dot_dimension_numbers<[1], [0], [0], [1], [0, 0, 1, 1], [], []>} : vector<2x784xf32>, vector<784x128xf32>, vector<2x128xf32> -> vector<2x128xf32>
    %c0_3 = arith.constant 0 : index
    %c0_4 = arith.constant 0 : index
    %3 = vector.load %arg3[%c0_3, %c0_4] : memref<1x128xf32, #tpu.memory_space<vmem>>, vector<1x128xf32>
    %4 = vector.broadcast %3 : vector<1x128xf32> to vector<2x128xf32>
    %5 = arith.addf %2, %4 : vector<2x128xf32>
    %cst_5 = arith.constant 0.000000e+00 : f32
    %6 = vector.broadcast %cst_5 : f32 to vector<2x128xf32>
    %7 = arith.maximumf %5, %6 : vector<2x128xf32>
    %c0_6 = arith.constant 0 : index
    %c0_7 = arith.constant 0 : index
    %8 = vector.load %arg4[%c0_6, %c0_7] : memref<128x128xf32, #tpu.memory_space<vmem>>, vector<128x128xf32>
    %cst_8 = arith.constant dense<0.000000e+00> : vector<2x128xf32>
    %9 = tpu.matmul %7, %8, %cst_8 {dimension_numbers = #tpu.dot_dimension_numbers<[1], [0], [0], [1], [0, 0, 1, 1], [], []>} : vector<2x128xf32>, vector<128x128xf32>, vector<2x128xf32> -> vector<2x128xf32>
    %c0_9 = arith.constant 0 : index
    %c0_10 = arith.constant 0 : index
    %10 = vector.load %arg5[%c0_9, %c0_10] : memref<1x128xf32, #tpu.memory_space<vmem>>, vector<1x128xf32>
    %11 = vector.broadcast %10 : vector<1x128xf32> to vector<2x128xf32>
    %12 = arith.addf %9, %11 : vector<2x128xf32>
    %c0_11 = arith.constant 0 : index
    %c0_12 = arith.constant 0 : index
    %13 = vector.load %arg6[%c0_11, %c0_12] : memref<2x128xf32, #tpu.memory_space<vmem>>, vector<2x128xf32>
    tpu.vector_store %arg6[%c0_11, %c0_12], %12 {strides = array<i32>} : memref<2x128xf32, #tpu.memory_space<vmem>>, vector<2x128xf32>,
    return
  }
  func.func @transform_0(%arg0: i32) -> (i32, i32) {
    %c0_i32 = arith.constant 0 : i32
    %c0_i32_0 = arith.constant 0 : i32
    return %arg0, %c0_i32 : i32, i32
  }
  func.func @transform_1(%arg0: i32) -> (i32, i32) {
    %c0_i32 = arith.constant 0 : i32
    %c0_i32_0 = arith.constant 0 : i32
    %c0_i32_1 = arith.constant 0 : i32
    return %c0_i32, %c0_i32_0 : i32, i32
  }
  func.func @transform_2(%arg0: i32) -> (i32, i32) {
    %c0_i32 = arith.constant 0 : i32
    %c0_i32_0 = arith.constant 0 : i32
    %c0_i32_1 = arith.constant 0 : i32
    return %c0_i32, %c0_i32_0 : i32, i32
  }
  func.func @transform_3(%arg0: i32) -> (i32, i32) {
    %c0_i32 = arith.constant 0 : i32
    %c0_i32_0 = arith.constant 0 : i32
    %c0_i32_1 = arith.constant 0 : i32
    return %c0_i32, %c0_i32_0 : i32, i32
  }
  func.func @transform_4(%arg0: i32) -> (i32, i32) {
    %c0_i32 = arith.constant 0 : i32
    %c0_i32_0 = arith.constant 0 : i32
    %c0_i32_1 = arith.constant 0 : i32
    return %c0_i32, %c0_i32_0 : i32, i32
  }
  func.func @transform_5(%arg0: i32) -> (i32, i32) {
    %c0_i32 = arith.constant 0 : i32
    %c0_i32_0 = arith.constant 0 : i32
    return %arg0, %c0_i32 : i32, i32
  }
}

</mosaic_0001>

<llo_original>
// kernel: net_forward.1
$region0: #{net_forward.1}
  #allocation0 [shape = 'u32[]', space=smem, size = 0x4, offset = 0x4, fixed_abs, tag = 'smem constant byte address 0x4 - core index']
  #allocation1 [shape = 'u32[144,128]{1,0:T(1,128)}', space=vmem, size = 0x12000, scoped, tag = 'internal scratch']
  %s0 = inlined_call_operand.vmem [shape: f32[2,784], index: 0, kind: input, shape index: {}]
  %s1 = inlined_call_operand.vmem [shape: f32[784,128], index: 1, kind: input, shape index: {}]
  %s2 = inlined_call_operand.vmem [shape: f32[1,128], index: 2, kind: input, shape index: {}]
  %s3 = inlined_call_operand.vmem [shape: f32[128,128], index: 3, kind: input, shape index: {}]
  %s4 = inlined_call_operand.vmem [shape: f32[1,128], index: 4, kind: input, shape index: {}]
  %s5 = inlined_call_operand.hbm [shape: f32[2,128], index: 5, kind: output, shape index: {}]
  %s6 = sld [smem:[#allocation0]]
  $region30: #{net_forward.1} parent=0
    _
  %s8 = ssub.s32 1, %s6
  %s9 = scalar_select 0, %s8, %s6
  $region1: #{net_forward.1} parent=0
    #allocation2 [shape = 'u8[1024]{0}', space=vmem, size = 0x400, scoped, tag = 'output window, operand 0, single buffered']
    #allocation3 [shape = 's32[1]{0}', space=sflag, size = 0x4, scoped, tag = 'scoped memory for net_forward.1']
    %10 = vsyncpa [#allocation3], 0
    // Predicated region
    $region2: #{net_forward.1} parent=1 // pred_check
      _
    $region3: #{net_forward.1} parent=1 // pred_check_branch
      %12 = sbr.rel (0) target = $region5
    $region4: #{net_forward.1} parent=1 // pred_region
      _
    $region5: #{net_forward.1} parent=1 // pred_fallthru
      _
    // Predicated region
    $region6: #{net_forward.1} parent=1 // pred_check
      _
    $region7: #{net_forward.1} parent=1 // pred_check_branch
      %14 = sbr.rel (0) target = $region9
    $region8: #{net_forward.1} parent=1 // pred_region
      _
    $region9: #{net_forward.1} parent=1 // pred_fallthru
      _
    // Predicated region
    $region10: #{net_forward.1} parent=1 // pred_check
      _
    $region11: #{net_forward.1} parent=1 // pred_check_branch
      %16 = sbr.rel (0) target = $region13
    $region12: #{net_forward.1} parent=1 // pred_region
      _
    $region13: #{net_forward.1} parent=1 // pred_fallthru
      _
    // Predicated region
    $region14: #{net_forward.1} parent=1 // pred_check
      _
    $region15: #{net_forward.1} parent=1 // pred_check_branch
      %18 = sbr.rel (0) target = $region17
    $region16: #{net_forward.1} parent=1 // pred_region
      _
    $region17: #{net_forward.1} parent=1 // pred_fallthru
      _
    // Predicated region
    $region18: #{net_forward.1} parent=1 // pred_check
      _
    $region19: #{net_forward.1} parent=1 // pred_check_branch
      %20 = sbr.rel (0) target = $region21
    $region20: #{net_forward.1} parent=1 // pred_region
      _
    $region21: #{net_forward.1} parent=1 // pred_fallthru
      _
    %v21 = vld [vmem:[%s0] sm:$0xff]
    %v22 = vld [vmem:[%s0 + $0x8] sm:$0x3f]
    %v23 = vld [vmem:[%s1] sm:$0xff]
    %v24 = vld [vmem:[%s1 + $0x8] sm:$0xff]
    %v25 = vld [vmem:[%s1 + $0x10] sm:$0xff]
    %v26 = vld [vmem:[%s1 + $0x18] sm:$0xff]
    %v27 = vld [vmem:[%s1 + $0x20] sm:$0xff]
    %v28 = vld [vmem:[%s1 + $0x28] sm:$0xff]
    %v29 = vld [vmem:[%s1 + $0x30] sm:$0xff]
    %v30 = vld [vmem:[%s1 + $0x38] sm:$0xff]
    %v31 = vld [vmem:[%s1 + $0x40] sm:$0xff]
    %v32 = vld [vmem:[%s1 + $0x48] sm:$0xff]
    %v33 = vld [vmem:[%s1 + $0x50] sm:$0xff]
    %v34 = vld [vmem:[%s1 + $0x58] sm:$0xff]
    %v35 = vld [vmem:[%s1 + $0x60] sm:$0xff]
    %v36 = vld [vmem:[%s1 + $0x68] sm:$0xff]
    %v37 = vld [vmem:[%s1 + $0x70] sm:$0xff]
    %v38 = vld [vmem:[%s1 + $0x78] sm:$0xff]
    %v39 = vld [vmem:[%s1 + $0x80] sm:$0xff]
    %v40 = vld [vmem:[%s1 + $0x88] sm:$0xff]
    %v41 = vld [vmem:[%s1 + $0x90] sm:$0xff]
    %v42 = vld [vmem:[%s1 + $0x98] sm:$0xff]
    %v43 = vld [vmem:[%s1 + $0xa0] sm:$0xff]
    %v44 = vld [vmem:[%s1 + $0xa8] sm:$0xff]
    %v45 = vld [vmem:[%s1 + $0xb0] sm:$0xff]
    %v46 = vld [vmem:[%s1 + $0xb8] sm:$0xff]
    %v47 = vld [vmem:[%s1 + $0xc0] sm:$0xff]
    %v48 = vld [vmem:[%s1 + $0xc8] sm:$0xff]
    %v49 = vld [vmem:[%s1 + $0xd0] sm:$0xff]
    %v50 = vld [vmem:[%s1 + $0xd8] sm:$0xff]
    %v51 = vld [vmem:[%s1 + $0xe0] sm:$0xff]
    %v52 = vld [vmem:[%s1 + $0xe8] sm:$0xff]
    %v53 = vld [vmem:[%s1 + $0xf0] sm:$0xff]
    %v54 = vld [vmem:[%s1 + $0xf8] sm:$0xff]
    %v55 = vld [vmem:[%s1 + $0x100] sm:$0xff]
    %v56 = vld [vmem:[%s1 + $0x108] sm:$0xff]
    %v57 = vld [vmem:[%s1 + $0x110] sm:$0xff]
    %v58 = vld [vmem:[%s1 + $0x118] sm:$0xff]
    %v59 = vld [vmem:[%s1 + $0x120] sm:$0xff]
    %v60 = vld [vmem:[%s1 + $0x128] sm:$0xff]
    %v61 = vld [vmem:[%s1 + $0x130] sm:$0xff]
    %v62 = vld [vmem:[%s1 + $0x138] sm:$0xff]
    %v63 = vld [vmem:[%s1 + $0x140] sm:$0xff]
    %v64 = vld [vmem:[%s1 + $0x148] sm:$0xff]
    %v65 = vld [vmem:[%s1 + $0x150] sm:$0xff]
    %v66 = vld [vmem:[%s1 + $0x158] sm:$0xff]
    %v67 = vld [vmem:[%s1 + $0x160] sm:$0xff]
    %v68 = vld [vmem:[%s1 + $0x168] sm:$0xff]
    %v69 = vld [vmem:[%s1 + $0x170] sm:$0xff]
    %v70 = vld [vmem:[%s1 + $0x178] sm:$0xff]
    %v71 = vld [vmem:[%s1 + $0x180] sm:$0xff]
    %v72 = vld [vmem:[%s1 + $0x188] sm:$0xff]
    %v73 = vld [vmem:[%s1 + $0x190] sm:$0xff]
    %v74 = vld [vmem:[%s1 + $0x198] sm:$0xff]
    %v75 = vld [vmem:[%s1 + $0x1a0] sm:$0xff]
    %v76 = vld [vmem:[%s1 + $0x1a8] sm:$0xff]
    %v77 = vld [vmem:[%s1 + $0x1b0] sm:$0xff]
    %v78 = vld [vmem:[%s1 + $0x1b8] sm:$0xff]
    %v79 = vld [vmem:[%s1 + $0x1c0] sm:$0xff]
    %v80 = vld [vmem:[%s1 + $0x1c8] sm:$0xff]
    %v81 = vld [vmem:[%s1 + $0x1d0] sm:$0xff]
    %v82 = vld [vmem:[%s1 + $0x1d8] sm:$0xff]
    %v83 = vld [vmem:[%s1 + $0x1e0] sm:$0xff]
    %v84 = vld [vmem:[%s1 + $0x1e8] sm:$0xff]
    %v85 = vld [vmem:[%s1 + $0x1f0] sm:$0xff]
    %v86 = vld [vmem:[%s1 + $0x1f8] sm:$0xff]
    %v87 = vld [vmem:[%s1 + $0x200] sm:$0xff]
    %v88 = vld [vmem:[%s1 + $0x208] sm:$0xff]
    %v89 = vld [vmem:[%s1 + $0x210] sm:$0xff]
    %v90 = vld [vmem:[%s1 + $0x218] sm:$0xff]
    %v91 = vld [vmem:[%s1 + $0x220] sm:$0xff]
    %v92 = vld [vmem:[%s1 + $0x228] sm:$0xff]
    %v93 = vld [vmem:[%s1 + $0x230] sm:$0xff]
    %v94 = vld [vmem:[%s1 + $0x238] sm:$0xff]
    %v95 = vld [vmem:[%s1 + $0x240] sm:$0xff]
    %v96 = vld [vmem:[%s1 + $0x248] sm:$0xff]
    %v97 = vld [vmem:[%s1 + $0x250] sm:$0xff]
    %v98 = vld [vmem:[%s1 + $0x258] sm:$0xff]
    %v99 = vld [vmem:[%s1 + $0x260] sm:$0xff]
    %v100 = vld [vmem:[%s1 + $0x268] sm:$0xff]
    %v101 = vld [vmem:[%s1 + $0x270] sm:$0xff]
    %v102 = vld [vmem:[%s1 + $0x278] sm:$0xff]
    %v103 = vld [vmem:[%s1 + $0x280] sm:$0xff]
    %v104 = vld [vmem:[%s1 + $0x288] sm:$0xff]
    %v105 = vld [vmem:[%s1 + $0x290] sm:$0xff]
    %v106 = vld [vmem:[%s1 + $0x298] sm:$0xff]
    %v107 = vld [vmem:[%s1 + $0x2a0] sm:$0xff]
    %v108 = vld [vmem:[%s1 + $0x2a8] sm:$0xff]
    %v109 = vld [vmem:[%s1 + $0x2b0] sm:$0xff]
    %v110 = vld [vmem:[%s1 + $0x2b8] sm:$0xff]
    %v111 = vld [vmem:[%s1 + $0x2c0] sm:$0xff]
    %v112 = vld [vmem:[%s1 + $0x2c8] sm:$0xff]
    %v113 = vld [vmem:[%s1 + $0x2d0] sm:$0xff]
    %v114 = vld [vmem:[%s1 + $0x2d8] sm:$0xff]
    %v115 = vld [vmem:[%s1 + $0x2e0] sm:$0xff]
    %v116 = vld [vmem:[%s1 + $0x2e8] sm:$0xff]
    %v117 = vld [vmem:[%s1 + $0x2f0] sm:$0xff]
    %v118 = vld [vmem:[%s1 + $0x2f8] sm:$0xff]
    %v119 = vld [vmem:[%s1 + $0x300] sm:$0xff]
    %v120 = vld [vmem:[%s1 + $0x308] sm:$0xff]
    %v121 = vld [vmem:[%s2] sm:$0x1]
    %v123 = vlaneseq
    %v124 = vshrl.u32 %v123, 7
    %v125 = vsub.s32 0, %v124
    %v126 = vrot.slane %v121, %v125
    %v130 = vcombine.high %v21, %v21
    %v132 = vunpack.c.l.s4 1983009808
    %v133 = vunpack.c.0.s8 %v132
    %v134 = vlaneseq
    %v135 = vshrl.u32 %v134, 7
    %v136 = vsub.s32 %v133, %v135
    %v137 = vrot.slane %v21, %v136
    %v139 = vunpack.c.l.s4 1983009808
    %v140 = vunpack.c.0.s8 %v139
    %v141 = vlaneseq
    %v142 = vshrl.u32 %v141, 7
    %v143 = vsub.s32 %v140, %v142
    %v144 = vrot.slane %v130, %v143
    %v145 = vcombine.high %v137, %v137
    %v146 = vcombine.high %v144, %v144
    %v147 = vcombine.high %v22, %v22
    %v149 = vunpack.c.l.s4 1983009808
    %v150 = vunpack.c.0.s8 %v149
    %v151 = vlaneseq
    %v152 = vshrl.u32 %v151, 7
    %v153 = vsub.s32 %v150, %v152
    %v154 = vrot.slane %v22, %v153
    %v156 = vunpack.c.l.s4 1983009808
    %v157 = vunpack.c.0.s8 %v156
    %v158 = vlaneseq
    %v159 = vshrl.u32 %v158, 7
    %v160 = vsub.s32 %v157, %v159
    %v161 = vrot.slane %v147, %v160
    %v162 = vcombine.high %v154, %v154
    %vm169 = vcmask 130048
    %v170 = vsel %vm169, %v161, 0
    %172 = vmatprep.subr.mxu0 0.0
    %173 = vmatpush1.msra.mxu0 %v23
    %174 = vmatprep.subr.mxu0 0.0
    %175 = vmatpush1.msra.mxu0 %v24
    %176 = vmatprep.subr.mxu0 0.0
    %177 = vmatpush1.msra.mxu0 %v25
    %178 = vmatprep.subr.mxu0 0.0
    %179 = vmatpush1.msra.mxu0 %v26
    %180 = vmatprep.subr.mxu0 0.0
    %181 = vmatpush1.msra.mxu0 %v27
    %182 = vmatprep.subr.mxu0 0.0
    %183 = vmatpush1.msra.mxu0 %v28
    %184 = vmatprep.subr.mxu0 0.0
    %185 = vmatpush1.msra.mxu0 %v29
    %186 = vmatprep.subr.mxu0 0.0
    %187 = vmatpush1.msra.mxu0 %v30
    %188 = vmatprep.subr.mxu0 0.0
    %189 = vmatpush1.msra.mxu0 %v31
    %190 = vmatprep.subr.mxu0 0.0
    %191 = vmatpush1.msra.mxu0 %v32
    %192 = vmatprep.subr.mxu0 0.0
    %193 = vmatpush1.msra.mxu0 %v33
    %194 = vmatprep.subr.mxu0 0.0
    %195 = vmatpush1.msra.mxu0 %v34
    %196 = vmatprep.subr.mxu0 0.0
    %197 = vmatpush1.msra.mxu0 %v35
    %198 = vmatprep.subr.mxu0 0.0
    %199 = vmatpush1.msra.mxu0 %v36
    %200 = vmatprep.subr.mxu0 0.0
    %201 = vmatpush1.msra.mxu0 %v37
    %202 = vmatprep.subr.mxu0 0.0
    %203 = vmatpush1.msra.mxu0 %v38
    %204 = vmatprep.subr.mxu0 0.0
    %205 = vmatpush1.msra.mxu0 %v39
    %206 = vmatprep.subr.mxu0 0.0
    %207 = vmatpush1.msra.mxu0 %v40
    %208 = vmatprep.subr.mxu0 0.0
    %209 = vmatpush1.msra.mxu0 %v41
    %210 = vmatprep.subr.mxu0 0.0
    %211 = vmatpush1.msra.mxu0 %v42
    %212 = vmatprep.subr.mxu0 0.0
    %213 = vmatpush1.msra.mxu0 %v43
    %214 = vmatprep.subr.mxu0 0.0
    %215 = vmatpush1.msra.mxu0 %v44
    %216 = vmatprep.subr.mxu0 0.0
    %217 = vmatpush1.msra.mxu0 %v45
    %218 = vmatprep.subr.mxu0 0.0
    %219 = vmatpush1.msra.mxu0 %v46
    %220 = vmatprep.subr.mxu0 0.0
    %221 = vmatpush1.msra.mxu0 %v47
    %222 = vmatprep.subr.mxu0 0.0
    %223 = vmatpush1.msra.mxu0 %v48
    %224 = vmatprep.subr.mxu0 0.0
    %225 = vmatpush1.msra.mxu0 %v49
    %226 = vmatprep.subr.mxu0 0.0
    %227 = vmatpush1.msra.mxu0 %v50
    %228 = vmatprep.subr.mxu0 0.0
    %229 = vmatpush1.msra.mxu0 %v51
    %230 = vmatprep.subr.mxu0 0.0
    %231 = vmatpush1.msra.mxu0 %v52
    %232 = vmatprep.subr.mxu0 0.0
    %233 = vmatpush1.msra.mxu0 %v53
    %234 = vmatprep.subr.mxu0 0.0
    %235 = vmatpush1.msra.mxu0 %v54
    %236 = vmatprep.mubr.f32.mxu0 %v145
    %237 = vmatmul.mubr.f32.gmra.mrb[0].mxu0 %v137
    %v238 = vpop.f32.mrb[0].mxu0
    %v239 = vadd.f32 %v126, %v238
    %v240 = vpop.f32.mrb[0].mxu0
    %241 = vdwg.mxu0
    %242 = vmatprep.subr.mxu0 0.0
    %243 = vmatpush1.msra.mxu0 %v55
    %244 = vmatprep.subr.mxu0 0.0
    %245 = vmatpush1.msra.mxu0 %v56
    %246 = vmatprep.subr.mxu0 0.0
    %247 = vmatpush1.msra.mxu0 %v57
    %248 = vmatprep.subr.mxu0 0.0
    %249 = vmatpush1.msra.mxu0 %v58
    %250 = vmatprep.subr.mxu0 0.0
    %251 = vmatpush1.msra.mxu0 %v59
    %252 = vmatprep.subr.mxu0 0.0
    %253 = vmatpush1.msra.mxu0 %v60
    %254 = vmatprep.subr.mxu0 0.0
    %255 = vmatpush1.msra.mxu0 %v61
    %256 = vmatprep.subr.mxu0 0.0
    %257 = vmatpush1.msra.mxu0 %v62
    %258 = vmatprep.subr.mxu0 0.0
    %259 = vmatpush1.msra.mxu0 %v63
    %260 = vmatprep.subr.mxu0 0.0
    %261 = vmatpush1.msra.mxu0 %v64
    %262 = vmatprep.subr.mxu0 0.0
    %263 = vmatpush1.msra.mxu0 %v65
    %264 = vmatprep.subr.mxu0 0.0
    %265 = vmatpush1.msra.mxu0 %v66
    %266 = vmatprep.subr.mxu0 0.0
    %267 = vmatpush1.msra.mxu0 %v67
    %268 = vmatprep.subr.mxu0 0.0
    %269 = vmatpush1.msra.mxu0 %v68
    %270 = vmatprep.subr.mxu0 0.0
    %271 = vmatpush1.msra.mxu0 %v69
    %272 = vmatprep.subr.mxu0 0.0
    %273 = vmatpush1.msra.mxu0 %v70
    %274 = vmatprep.subr.mxu0 0.0
    %275 = vmatpush1.msra.mxu0 %v71
    %276 = vmatprep.subr.mxu0 0.0
    %277 = vmatpush1.msra.mxu0 %v72
    %278 = vmatprep.subr.mxu0 0.0
    %279 = vmatpush1.msra.mxu0 %v73
    %280 = vmatprep.subr.mxu0 0.0
    %281 = vmatpush1.msra.mxu0 %v74
    %282 = vmatprep.subr.mxu0 0.0
    %283 = vmatpush1.msra.mxu0 %v75
    %284 = vmatprep.subr.mxu0 0.0
    %285 = vmatpush1.msra.mxu0 %v76
    %286 = vmatprep.subr.mxu0 0.0
    %287 = vmatpush1.msra.mxu0 %v77
    %288 = vmatprep.subr.mxu0 0.0
    %289 = vmatpush1.msra.mxu0 %v78
    %290 = vmatprep.subr.mxu0 0.0
    %291 = vmatpush1.msra.mxu0 %v79
    %292 = vmatprep.subr.mxu0 0.0
    %293 = vmatpush1.msra.mxu0 %v80
    %294 = vmatprep.subr.mxu0 0.0
    %295 = vmatpush1.msra.mxu0 %v81
    %296 = vmatprep.subr.mxu0 0.0
    %297 = vmatpush1.msra.mxu0 %v82
    %298 = vmatprep.subr.mxu0 0.0
    %299 = vmatpush1.msra.mxu0 %v83
    %300 = vmatprep.subr.mxu0 0.0
    %301 = vmatpush1.msra.mxu0 %v84
    %302 = vmatprep.subr.mxu0 0.0
    %303 = vmatpush1.msra.mxu0 %v85
    %304 = vmatprep.subr.mxu0 0.0
    %305 = vmatpush1.msra.mxu0 %v86
    %306 = vmatprep.mubr.f32.mxu0 %v146
    %307 = vmatmul.mubr.f32.gmra.mrb[0].mxu0 %v144
    %v308 = vpop.f32.mrb[0].mxu0
    %v309 = vadd.f32 %v239, %v308
    %v310 = vpop.f32.mrb[0].mxu0
    %311 = vdwg.mxu0
    %312 = vmatprep.subr.mxu0 0.0
    %313 = vmatpush1.msra.mxu0 %v87
    %314 = vmatprep.subr.mxu0 0.0
    %315 = vmatpush1.msra.mxu0 %v88
    %316 = vmatprep.subr.mxu0 0.0
    %317 = vmatpush1.msra.mxu0 %v89
    %318 = vmatprep.subr.mxu0 0.0
    %319 = vmatpush1.msra.mxu0 %v90
    %320 = vmatprep.subr.mxu0 0.0
    %321 = vmatpush1.msra.mxu0 %v91
    %322 = vmatprep.subr.mxu0 0.0
    %323 = vmatpush1.msra.mxu0 %v92
    %324 = vmatprep.subr.mxu0 0.0
    %325 = vmatpush1.msra.mxu0 %v93
    %326 = vmatprep.subr.mxu0 0.0
    %327 = vmatpush1.msra.mxu0 %v94
    %328 = vmatprep.subr.mxu0 0.0
    %329 = vmatpush1.msra.mxu0 %v95
    %330 = vmatprep.subr.mxu0 0.0
    %331 = vmatpush1.msra.mxu0 %v96
    %332 = vmatprep.subr.mxu0 0.0
    %333 = vmatpush1.msra.mxu0 %v97
    %334 = vmatprep.subr.mxu0 0.0
    %335 = vmatpush1.msra.mxu0 %v98
    %336 = vmatprep.subr.mxu0 0.0
    %337 = vmatpush1.msra.mxu0 %v99
    %338 = vmatprep.subr.mxu0 0.0
    %339 = vmatpush1.msra.mxu0 %v100
    %340 = vmatprep.subr.mxu0 0.0
    %341 = vmatpush1.msra.mxu0 %v101
    %342 = vmatprep.subr.mxu0 0.0
    %343 = vmatpush1.msra.mxu0 %v102
    %344 = vmatprep.subr.mxu0 0.0
    %345 = vmatpush1.msra.mxu0 %v103
    %346 = vmatprep.subr.mxu0 0.0
    %347 = vmatpush1.msra.mxu0 %v104
    %348 = vmatprep.subr.mxu0 0.0
    %349 = vmatpush1.msra.mxu0 %v105
    %350 = vmatprep.subr.mxu0 0.0
    %351 = vmatpush1.msra.mxu0 %v106
    %352 = vmatprep.subr.mxu0 0.0
    %353 = vmatpush1.msra.mxu0 %v107
    %354 = vmatprep.subr.mxu0 0.0
    %355 = vmatpush1.msra.mxu0 %v108
    %356 = vmatprep.subr.mxu0 0.0
    %357 = vmatpush1.msra.mxu0 %v109
    %358 = vmatprep.subr.mxu0 0.0
    %359 = vmatpush1.msra.mxu0 %v110
    %360 = vmatprep.subr.mxu0 0.0
    %361 = vmatpush1.msra.mxu0 %v111
    %362 = vmatprep.subr.mxu0 0.0
    %363 = vmatpush1.msra.mxu0 %v112
    %364 = vmatprep.subr.mxu0 0.0
    %365 = vmatpush1.msra.mxu0 %v113
    %366 = vmatprep.subr.mxu0 0.0
    %367 = vmatpush1.msra.mxu0 %v114
    %368 = vmatprep.subr.mxu0 0.0
    %369 = vmatpush1.msra.mxu0 %v115
    %370 = vmatprep.subr.mxu0 0.0
    %371 = vmatpush1.msra.mxu0 %v116
    %372 = vmatprep.subr.mxu0 0.0
    %373 = vmatpush1.msra.mxu0 %v117
    %374 = vmatprep.subr.mxu0 0.0
    %375 = vmatpush1.msra.mxu0 %v118
    %376 = vmatprep.mubr.f32.mxu0 %v162
    %377 = vmatmul.mubr.f32.gmra.mrb[0].mxu0 %v154
    %v378 = vpop.f32.mrb[0].mxu0
    %v379 = vadd.f32 %v309, %v378
    %v380 = vpop.f32.mrb[0].mxu0
    %381 = vdwg.mxu0
    %382 = vmatprep.subr.mxu0 0.0
    %383 = vmatpush1.msra.mxu0 %v119
    %384 = vmatprep.subr.mxu0 0.0
    %385 = vmatpush1.msra.mxu0 %v120
    %386 = vmatprep.subr.mxu0 0.0
    %387 = vmatpush1.msra.mxu0 0.0
    %388 = vmatprep.subr.mxu0 0.0
    %389 = vmatpush1.msra.mxu0 0.0
    %390 = vmatprep.subr.mxu0 0.0
    %391 = vmatpush1.msra.mxu0 0.0
    %392 = vmatprep.subr.mxu0 0.0
    %393 = vmatpush1.msra.mxu0 0.0
    %394 = vmatprep.subr.mxu0 0.0
    %395 = vmatpush1.msra.mxu0 0.0
    %396 = vmatprep.subr.mxu0 0.0
    %397 = vmatpush1.msra.mxu0 0.0
    %398 = vmatprep.subr.mxu0 0.0
    %399 = vmatpush1.msra.mxu0 0.0
    %400 = vmatprep.subr.mxu0 0.0
    %401 = vmatpush1.msra.mxu0 0.0
    %402 = vmatprep.subr.mxu0 0.0
    %403 = vmatpush1.msra.mxu0 0.0
    %404 = vmatprep.subr.mxu0 0.0
    %405 = vmatpush1.msra.mxu0 0.0
    %406 = vmatprep.subr.mxu0 0.0
    %407 = vmatpush1.msra.mxu0 0.0
    %408 = vmatprep.subr.mxu0 0.0
    %409 = vmatpush1.msra.mxu0 0.0
    %410 = vmatprep.subr.mxu0 0.0
    %411 = vmatpush1.msra.mxu0 0.0
    %412 = vmatprep.subr.mxu0 0.0
    %413 = vmatpush1.msra.mxu0 0.0
    %414 = vmatprep.subr.mxu0 0.0
    %415 = vmatpush1.msra.mxu0 0.0
    %416 = vmatprep.subr.mxu0 0.0
    %417 = vmatpush1.msra.mxu0 0.0
    %418 = vmatprep.subr.mxu0 0.0
    %419 = vmatpush1.msra.mxu0 0.0
    %420 = vmatprep.subr.mxu0 0.0
    %421 = vmatpush1.msra.mxu0 0.0
    %422 = vmatprep.subr.mxu0 0.0
    %423 = vmatpush1.msra.mxu0 0.0
    %424 = vmatprep.subr.mxu0 0.0
    %425 = vmatpush1.msra.mxu0 0.0
    %426 = vmatprep.subr.mxu0 0.0
    %427 = vmatpush1.msra.mxu0 0.0
    %428 = vmatprep.subr.mxu0 0.0
    %429 = vmatpush1.msra.mxu0 0.0
    %430 = vmatprep.subr.mxu0 0.0
    %431 = vmatpush1.msra.mxu0 0.0
    %432 = vmatprep.subr.mxu0 0.0
    %433 = vmatpush1.msra.mxu0 0.0
    %434 = vmatprep.subr.mxu0 0.0
    %435 = vmatpush1.msra.mxu0 0.0
    %436 = vmatprep.subr.mxu0 0.0
    %437 = vmatpush1.msra.mxu0 0.0
    %438 = vmatprep.subr.mxu0 0.0
    %439 = vmatpush1.msra.mxu0 0.0
    %440 = vmatprep.subr.mxu0 0.0
    %441 = vmatpush1.msra.mxu0 0.0
    %442 = vmatprep.subr.mxu0 0.0
    %443 = vmatpush1.msra.mxu0 0.0
    %444 = vmatprep.subr.mxu0 0.0
    %445 = vmatpush1.msra.mxu0 0.0
    %446 = vmatprep.mubr.f32.mxu0 0.0
    %447 = vmatmul.mubr.f32.gmra.mrb[0].mxu0 %v170
    %v448 = vpop.f32.mrb[0].mxu0
    %v449 = vadd.f32 %v379, %v448
    %v450 = vpop.f32.mrb[0].mxu0
    %451 = vdwg.mxu0
    %v452 = vmax.f32 %v449, 0.0
    %v453 = vld [vmem:[%s3] sm:$0xff]
    %v454 = vld [vmem:[%s3 + $0x8] sm:$0xff]
    %v455 = vld [vmem:[%s3 + $0x10] sm:$0xff]
    %v456 = vld [vmem:[%s3 + $0x18] sm:$0xff]
    %v457 = vld [vmem:[%s3 + $0x20] sm:$0xff]
    %v458 = vld [vmem:[%s3 + $0x28] sm:$0xff]
    %v459 = vld [vmem:[%s3 + $0x30] sm:$0xff]
    %v460 = vld [vmem:[%s3 + $0x38] sm:$0xff]
    %v461 = vld [vmem:[%s3 + $0x40] sm:$0xff]
    %v462 = vld [vmem:[%s3 + $0x48] sm:$0xff]
    %v463 = vld [vmem:[%s3 + $0x50] sm:$0xff]
    %v464 = vld [vmem:[%s3 + $0x58] sm:$0xff]
    %v465 = vld [vmem:[%s3 + $0x60] sm:$0xff]
    %v466 = vld [vmem:[%s3 + $0x68] sm:$0xff]
    %v467 = vld [vmem:[%s3 + $0x70] sm:$0xff]
    %v468 = vld [vmem:[%s3 + $0x78] sm:$0xff]
    %v469 = vld [vmem:[%s4] sm:$0x1]
    %v471 = vlaneseq
    %v472 = vshrl.u32 %v471, 7
    %v473 = vsub.s32 0, %v472
    %v474 = vrot.slane %v469, %v473
    %476 = vmatprep.subr.mxu0 0.0
    %477 = vmatpush1.msra.mxu0 %v453
    %478 = vmatprep.subr.mxu0 0.0
    %479 = vmatpush1.msra.mxu0 %v454
    %480 = vmatprep.subr.mxu0 0.0
    %481 = vmatpush1.msra.mxu0 %v455
    %482 = vmatprep.subr.mxu0 0.0
    %483 = vmatpush1.msra.mxu0 %v456
    %484 = vmatprep.subr.mxu0 0.0
    %485 = vmatpush1.msra.mxu0 %v457
    %486 = vmatprep.subr.mxu0 0.0
    %487 = vmatpush1.msra.mxu0 %v458
    %488 = vmatprep.subr.mxu0 0.0
    %489 = vmatpush1.msra.mxu0 %v459
    %490 = vmatprep.subr.mxu0 0.0
    %491 = vmatpush1.msra.mxu0 %v460
    %492 = vmatprep.subr.mxu0 0.0
    %493 = vmatpush1.msra.mxu0 %v461
    %494 = vmatprep.subr.mxu0 0.0
    %495 = vmatpush1.msra.mxu0 %v462
    %496 = vmatprep.subr.mxu0 0.0
    %497 = vmatpush1.msra.mxu0 %v463
    %498 = vmatprep.subr.mxu0 0.0
    %499 = vmatpush1.msra.mxu0 %v464
    %500 = vmatprep.subr.mxu0 0.0
    %501 = vmatpush1.msra.mxu0 %v465
    %502 = vmatprep.subr.mxu0 0.0
    %503 = vmatpush1.msra.mxu0 %v466
    %504 = vmatprep.subr.mxu0 0.0
    %505 = vmatpush1.msra.mxu0 %v467
    %506 = vmatprep.subr.mxu0 0.0
    %507 = vmatpush1.msra.mxu0 %v468
    %508 = vmatprep.subr.mxu0 0.0
    %509 = vmatpush1.msra.mxu0 0.0
    %510 = vmatprep.subr.mxu0 0.0
    %511 = vmatpush1.msra.mxu0 0.0
    %512 = vmatprep.subr.mxu0 0.0
    %513 = vmatpush1.msra.mxu0 0.0
    %514 = vmatprep.subr.mxu0 0.0
    %515 = vmatpush1.msra.mxu0 0.0
    %516 = vmatprep.subr.mxu0 0.0
    %517 = vmatpush1.msra.mxu0 0.0
    %518 = vmatprep.subr.mxu0 0.0
    %519 = vmatpush1.msra.mxu0 0.0
    %520 = vmatprep.subr.mxu0 0.0
    %521 = vmatpush1.msra.mxu0 0.0
    %522 = vmatprep.subr.mxu0 0.0
    %523 = vmatpush1.msra.mxu0 0.0
    %524 = vmatprep.subr.mxu0 0.0
    %525 = vmatpush1.msra.mxu0 0.0
    %526 = vmatprep.subr.mxu0 0.0
    %527 = vmatpush1.msra.mxu0 0.0
    %528 = vmatprep.subr.mxu0 0.0
    %529 = vmatpush1.msra.mxu0 0.0
    %530 = vmatprep.subr.mxu0 0.0
    %531 = vmatpush1.msra.mxu0 0.0
    %532 = vmatprep.subr.mxu0 0.0
    %533 = vmatpush1.msra.mxu0 0.0
    %534 = vmatprep.subr.mxu0 0.0
    %535 = vmatpush1.msra.mxu0 0.0
    %536 = vmatprep.subr.mxu0 0.0
    %537 = vmatpush1.msra.mxu0 0.0
    %538 = vmatprep.subr.mxu0 0.0
    %539 = vmatpush1.msra.mxu0 0.0
    %540 = vmatprep.mubr.f32.mxu0 0.0
    %541 = vmatmul.mubr.f32.gmra.mrb[0].mxu0 %v452
    %v542 = vpop.f32.mrb[0].mxu0
    %v543 = vadd.f32 %v474, %v542
    %v544 = vpop.f32.mrb[0].mxu0
    %545 = vdwg.mxu0
    %546 = vst [vmem:[#allocation2] sm:$0x3] %v543
    // Predicated region
    $region22: #{net_forward.1} parent=1 // pred_check
      _
    $region23: #{net_forward.1} parent=1 // pred_check_branch
      %548 = sbr.rel (0) target = $region25
    $region24: #{net_forward.1} parent=1 // pred_region
      %s550 = ssub.s32 32, 32
      %551 = vsyncadd [#allocation3], %s550
      %s553 = sshll.u32 [#allocation2], 4
      %s554 = int_to_ptr.vmem [resolvable:$true] %s553
      %556 = dma.vmem_to_hbm [thread:$0]  %s554, 32, %s5, [#allocation3]
    $region25: #{net_forward.1} parent=1 // pred_fallthru
      _
    // Predicated region
    $region26: #{net_forward.1} parent=1 // pred_check
      _
    $region27: #{net_forward.1} parent=1 // pred_check_branch
      %558 = sbr.rel (0) target = $region29
    $region28: #{net_forward.1} parent=1 // pred_region
      %559 = dma.done [#allocation3], 32
    $region29: #{net_forward.1} parent=1 // pred_fallthru
      _
    %560 = vsyncpa [#allocation3], 1

</llo_original>
